<compile_context>
chip_gen: v5e
topology: v5e:2x2
jax: 0.10.0
libtpu: 0.0.40
codegen_flags: <defaults>
</compile_context>

<pallas_src>
import jax
import jax.numpy as jnp
from jax.experimental import pallas as pl
from jax.experimental.pallas import tpu as pltpu

_LANES = 128
_SUBLANES = 8


def _round_up(x, m):
    return ((x + m - 1) // m) * m


def _elu(x):
    # ELU(alpha=1): x for x > 0 else exp(x) - 1 (clamped arg avoids inf in the
    # unselected branch).
    return jnp.where(x > 0, x, jnp.exp(jnp.minimum(x, 0.0)) - 1.0)


def _make_kernel(ln, n_actions):
    """Kernel closure over the static lane width and action count."""

    def kernel(obs_ref, p_ref, w_ref, out_ref):
        obs = obs_ref[...]                                   # (TB, 3) f32

        # Layer 0: folded embedders + obs_layer.  K == 3, so three VPU
        # broadcast-FMAs beat a 3/256-utilized MXU push on every chip.
        h = (obs[:, 0:1] * p_ref[0:1, :]
             + obs[:, 1:2] * p_ref[1:2, :]
             + obs[:, 2:3] * p_ref[2:3, :]
             + p_ref[3:4, :])
        h = jnp.maximum(h, 0.0)                              # ReLU, (TB, ln)

        # hidden_linear_layer x2: Linear (bf16 MXU, f32 accumulate) -> ELU.
        # TODO(synk): dropout is identity (eval/inference semantics), no RNG drawn.
        h = _elu(jnp.dot(h.astype(jnp.bfloat16), w_ref[0:ln, :],
                         preferred_element_type=jnp.float32) + p_ref[4:5, :])
        h = _elu(jnp.dot(h.astype(jnp.bfloat16), w_ref[ln:2 * ln, :],
                         preferred_element_type=jnp.float32) + p_ref[5:6, :])

        # Folded dueling head: value + (adv - mean(adv)) == h @ w_out + b_out.
        y = (jnp.dot(h.astype(jnp.bfloat16), w_ref[2 * ln:3 * ln, :],
                     preferred_element_type=jnp.float32) + p_ref[6:7, :])
        # Narrow store: block last dim equals the full (n_actions) array dim,
        # so HBM output traffic is B*n_actions*4 bytes, not a 128-lane slab.
        out_ref[...] = y[:, :n_actions]

    return kernel


def fold_and_pack_params(params, *, n_hidden, H, n_actions):
    """One-time setup: fold embedders+obs_layer and the dueling head, then pack
    into (a) a tiny f32 slab (layer-0 weights + all biases) and (b) one
    zero-padded, lane-dense bf16 slab holding the three MXU matmul weights."""
    ln = _round_up(max(n_hidden, H, n_actions), _LANES)

    # (1) embedders (in_features == 1) + obs_layer -> (3, n_hidden) + (1, n_hidden)
    w_eff = jnp.concatenate([params["w_s"] @ params["w_os"],
                             params["w_a"] @ params["w_oa"],
                             params["w_p"] @ params["w_op"]], axis=0)
    b_eff = (params["b_s"] @ params["w_os"] + params["b_a"] @ params["w_oa"]
             + params["b_p"] @ params["w_op"] + params["b_o"])

    # (2) dueling combine folded into the head matmul (exact algebra).
    w_out = (params["w_v"] @ jnp.ones((1, n_actions), jnp.float32)
             + params["w_adv"] - params["w_adv"].mean(axis=1, keepdims=True))
    b_out = (params["b_v"]
             + params["b_adv"] - params["b_adv"].mean(axis=1, keepdims=True))

    # f32 slab: rows 0..2 folded layer-0 weights, row 3 its bias, rows 4..6 the
    # hidden/head biases (kept f32 so they add after f32 MXU accumulation).
    p_slab = jnp.zeros((_SUBLANES, ln), jnp.float32)
    p_slab = p_slab.at[0:3, :n_hidden].set(w_eff)
    p_slab = p_slab.at[3, :n_hidden].set(b_eff[0])
    p_slab = p_slab.at[4, :H].set(params["b_h1"][0])
    p_slab = p_slab.at[5, :H].set(params["b_h2"][0])
    p_slab = p_slab.at[6, :n_actions].set(b_out[0])

    # bf16 slab: wh1 | wh2 | folded w_out stacked along sublanes, each (ln, ln).
    m_slab = jnp.zeros((3 * ln, ln), jnp.float32)
    m_slab = m_slab.at[0:n_hidden, :H].set(params["w_h1"])
    m_slab = m_slab.at[ln:ln + H, :H].set(params["w_h2"])
    m_slab = m_slab.at[2 * ln:2 * ln + H, :n_actions].set(w_out)
    m_slab = m_slab.astype(jnp.bfloat16)

    layout = dict(ln=ln, n_actions=n_actions)
    return p_slab, m_slab, layout


def effd3qn_split_forward(observation, p_slab, m_slab, layout):
    """Batched forward: batch grid with resident weights, narrow output."""
    B = observation.shape[0]
    ln = layout["ln"]
    n_actions = layout["n_actions"]

    # Batch tile: big tiles amortize the ~0.35 us per-step overhead and MXU
    # fill/drain; per-tile VMEM (obs + output + intermediates) stays far under
    # the v7x 64 MiB limit even at 1024 rows.  For big batches keep >= 2 grid
    # steps so the "parallel" axis can shard across v7x's two TensorCores.
    tb = min(1024, _round_up(B, _SUBLANES))
    if B >= 512:
        tb = min(tb, _round_up(pl.cdiv(B, 2), _SUBLANES))
    grid = (pl.cdiv(B, tb),)

    cost = pl.CostEstimate(
        flops=2 * B * ln * ln * 3,
        transcendentals=2 * B * ln,
        bytes_accessed=(observation.size * observation.dtype.itemsize
                        + p_slab.size * 4 + m_slab.size * 2
                        + B * n_actions * 4),
    )

    return pl.pallas_call(
        _make_kernel(ln, n_actions),
        out_shape=jax.ShapeDtypeStruct((B, n_actions), jnp.float32),
        grid=grid,
        in_specs=[
            pl.BlockSpec((tb, 3), lambda i: (i, 0)),          # obs tile
            pl.BlockSpec(p_slab.shape, lambda i: (0, 0)),     # f32 params, resident
            pl.BlockSpec(m_slab.shape, lambda i: (0, 0)),     # bf16 weights, resident
        ],
        out_specs=pl.BlockSpec((tb, n_actions), lambda i: (i, 0)),
        compiler_params=pltpu.CompilerParams(
            dimension_semantics=("parallel",)),               # v7x: 2 TCs
        cost_estimate=cost,
    )(observation, p_slab, m_slab)


# ----------------------------- setup & reference -----------------------------

def _linear_params(key, fan_in, fan_out):
    """PyTorch nn.Linear default init: U[-1/sqrt(in), 1/sqrt(in)]."""
    kw, kb = jax.random.split(key)
    bound = 1.0 / float(fan_in) ** 0.5
    w = jax.random.uniform(kw, (fan_in, fan_out), jnp.float32, -bound, bound)
    b = jax.random.uniform(kb, (1, fan_out), jnp.float32, -bound, bound)
    return w, b


def make_params(key, *, n_actions, action_size, state_size,
                action_embedding_size, state_embedding_size, n_hidden, H):
    keys = jax.random.split(key, 9)
    p = {}
    p["w_s"], p["b_s"] = _linear_params(keys[0], state_size, state_embedding_size)
    p["w_a"], p["b_a"] = _linear_params(keys[1], action_size, action_embedding_size)
    p["w_p"], p["b_p"] = _linear_params(keys[2], action_size, action_embedding_size)
    w_o, p["b_o"] = _linear_params(
        keys[3], state_embedding_size + 2 * action_embedding_size, n_hidden)
    se, ae = state_embedding_size, action_embedding_size
    p["w_os"] = w_o[0:se, :]
    p["w_oa"] = w_o[se:se + ae, :]
    p["w_op"] = w_o[se + ae:se + 2 * ae, :]
    p["w_h1"], p["b_h1"] = _linear_params(keys[4], n_hidden, H)   # input_layer
    p["w_h2"], p["b_h2"] = _linear_params(keys[5], H, H)          # extra hidden (num_hidden=2)
    p["w_v"], p["b_v"] = _linear_params(keys[6], H, 1)
    p["w_adv"], p["b_adv"] = _linear_params(keys[7], H, n_actions)
    return p


def reference(obs, params):
    """Pure-JAX f32 reference matching the PyTorch forward (eval mode), unfolded."""
    s, a, p = obs[:, 0:1], obs[:, 1:2], obs[:, 2:3]
    s_emb = s @ params["w_s"] + params["b_s"]
    a_emb = a @ params["w_a"] + params["b_a"]
    p_emb = p @ params["w_p"] + params["b_p"]
    x = jnp.concatenate([s_emb, a_emb, p_emb], axis=1)
    w_o = jnp.concatenate([params["w_os"], params["w_oa"], params["w_op"]], axis=0)
    h = jax.nn.relu(x @ w_o + params["b_o"])
    h = jax.nn.elu(h @ params["w_h1"] + params["b_h1"])
    h = jax.nn.elu(h @ params["w_h2"] + params["b_h2"])
    value = h @ params["w_v"] + params["b_v"]
    adv = h @ params["w_adv"] + params["b_adv"]
    return value + (adv - adv.mean(axis=1, keepdims=True))


if __name__ == "__main__":
    n_actions = 4
    action_size = 1
    state_size = 1
    action_embedding_size = 8
    state_embedding_size = 8
    n_hidden = 32
    H = 32
    # num_hidden = 2 (input_layer + one extra hidden_linear_layer); drop_prob
    # unused (dropout is identity in eval mode).

    key = jax.random.PRNGKey(0)
    k_params, k_obs1, k_obs2 = jax.random.split(key, 3)
    params = make_params(k_params,
                         n_actions=n_actions, action_size=action_size,
                         state_size=state_size,
                         action_embedding_size=action_embedding_size,
                         state_embedding_size=state_embedding_size,
                         n_hidden=n_hidden, H=H)

    p_slab, m_slab, layout = fold_and_pack_params(
        params, n_hidden=n_hidden, H=H, n_actions=n_actions)

    # Small batch: single grid step.
    obs1 = jax.random.normal(k_obs1, (8, 3), jnp.float32)
    y1 = effd3qn_split_forward(obs1, p_slab, m_slab, layout)
    jax.block_until_ready(y1)
    y1_ref = reference(obs1, params)
    assert y1.shape == (8, n_actions), y1.shape
    # Tolerance accounts for bf16 matmul inputs (f32 accumulation); observed
    # error is ~1e-3 for these weight scales.
    assert jnp.allclose(y1, y1_ref, atol=2e-2, rtol=2e-2), (y1, y1_ref)

    # Larger batch: multi-step grid with a partial last tile (B % tb != 0).
    obs2 = jax.random.normal(k_obs2, (1000, 3), jnp.float32)
    y2 = effd3qn_split_forward(obs2, p_slab, m_slab, layout)
    jax.block_until_ready(y2)
    y2_ref = reference(obs2, params)
    assert y2.shape == (1000, n_actions), y2.shape
    assert jnp.allclose(y2, y2_ref, atol=2e-2, rtol=2e-2)

    print("KERNEL_OK")
</pallas_src>

<mosaic_0001>
module attributes {stable_mosaic.version = 11 : i64} {
  func.func @kernel(%arg0: i32, %arg1: memref<8x3xf32, #tpu.memory_space<vmem>>, %arg2: memref<8x128xf32, #tpu.memory_space<vmem>>, %arg3: memref<384x128xbf16, #tpu.memory_space<vmem>>, %arg4: memref<8x4xf32, #tpu.memory_space<vmem>>) attributes {dimension_semantics = [#tpu.dimension_semantics<parallel>], iteration_bounds = array<i64: 1>, scalar_prefetch = 0 : i64, scratch_operands = 0 : i64, tpu.core_type = #tpu.core_type<tc>, window_params = [{transform_indices = @transform_0, window_bounds = array<i64: 8, 3>}, {pipeline_mode = #tpu.pipeline_mode<synchronous>, transform_indices = @transform_1, window_bounds = array<i64: 8, 128>}, {pipeline_mode = #tpu.pipeline_mode<synchronous>, transform_indices = @transform_2, window_bounds = array<i64: 384, 128>}, {transform_indices = @transform_3, window_bounds = array<i64: 8, 4>}]} {
    %c0 = arith.constant 0 : index
    %c0_0 = arith.constant 0 : index
    %0 = vector.load %arg1[%c0, %c0_0] : memref<8x3xf32, #tpu.memory_space<vmem>>, vector<8x3xf32>
    %1 = vector.extract_strided_slice %0 {offsets = [0, 0], sizes = [8, 1], strides = [1, 1]} : vector<8x3xf32> to vector<8x1xf32>
    %c0_1 = arith.constant 0 : index
    %c0_2 = arith.constant 0 : index
    %2 = vector.load %arg2[%c0_1, %c0_2] : memref<8x128xf32, #tpu.memory_space<vmem>>, vector<1x128xf32>
    %3 = vector.broadcast %1 : vector<8x1xf32> to vector<8x128xf32>
    %4 = vector.broadcast %2 : vector<1x128xf32> to vector<8x128xf32>
    %5 = arith.mulf %3, %4 : vector<8x128xf32>
    %6 = vector.extract_strided_slice %0 {offsets = [0, 1], sizes = [8, 1], strides = [1, 1]} : vector<8x3xf32> to vector<8x1xf32>
    %c1 = arith.constant 1 : index
    %c0_3 = arith.constant 0 : index
    %7 = vector.load %arg2[%c1, %c0_3] : memref<8x128xf32, #tpu.memory_space<vmem>>, vector<1x128xf32>
    %8 = vector.broadcast %6 : vector<8x1xf32> to vector<8x128xf32>
    %9 = vector.broadcast %7 : vector<1x128xf32> to vector<8x128xf32>
    %10 = arith.mulf %8, %9 : vector<8x128xf32>
    %11 = arith.addf %5, %10 : vector<8x128xf32>
    %12 = vector.extract_strided_slice %0 {offsets = [0, 2], sizes = [8, 1], strides = [1, 1]} : vector<8x3xf32> to vector<8x1xf32>
    %c2 = arith.constant 2 : index
    %c0_4 = arith.constant 0 : index
    %13 = vector.load %arg2[%c2, %c0_4] : memref<8x128xf32, #tpu.memory_space<vmem>>, vector<1x128xf32>
    %14 = vector.broadcast %12 : vector<8x1xf32> to vector<8x128xf32>
    %15 = vector.broadcast %13 : vector<1x128xf32> to vector<8x128xf32>
    %16 = arith.mulf %14, %15 : vector<8x128xf32>
    %17 = arith.addf %11, %16 : vector<8x128xf32>
    %c3 = arith.constant 3 : index
    %c0_5 = arith.constant 0 : index
    %18 = vector.load %arg2[%c3, %c0_5] : memref<8x128xf32, #tpu.memory_space<vmem>>, vector<1x128xf32>
    %19 = vector.broadcast %18 : vector<1x128xf32> to vector<8x128xf32>
    %20 = arith.addf %17, %19 : vector<8x128xf32>
    %cst = arith.constant 0.000000e+00 : f32
    %21 = vector.broadcast %cst : f32 to vector<8x128xf32>
    %22 = arith.maximumf %20, %21 : vector<8x128xf32>
    %23 = arith.truncf %22 : vector<8x128xf32> to vector<8x128xbf16>
    %c0_6 = arith.constant 0 : index
    %c0_7 = arith.constant 0 : index
    %24 = vector.load %arg3[%c0_6, %c0_7] : memref<384x128xbf16, #tpu.memory_space<vmem>>, vector<128x128xbf16>
    %cst_8 = arith.constant dense<0.000000e+00> : vector<8x128xf32>
    %25 = tpu.matmul %23, %24, %cst_8 {dimension_numbers = #tpu.dot_dimension_numbers<[1], [0], [0], [1], [0, 0, 1, 1], [], []>} : vector<8x128xbf16>, vector<128x128xbf16>, vector<8x128xf32> -> vector<8x128xf32>
    %c4 = arith.constant 4 : index
    %c0_9 = arith.constant 0 : index
    %26 = vector.load %arg2[%c4, %c0_9] : memref<8x128xf32, #tpu.memory_space<vmem>>, vector<1x128xf32>
    %27 = vector.broadcast %26 : vector<1x128xf32> to vector<8x128xf32>
    %28 = arith.addf %25, %27 : vector<8x128xf32>
    %cst_10 = arith.constant 0.000000e+00 : f32
    %29 = vector.broadcast %cst_10 : f32 to vector<8x128xf32>
    %30 = arith.cmpf ogt, %28, %29 : vector<8x128xf32>
    %cst_11 = arith.constant 0.000000e+00 : f32
    %31 = vector.broadcast %cst_11 : f32 to vector<8x128xf32>
    %32 = arith.minimumf %28, %31 : vector<8x128xf32>
    %33 = math.exp %32 : vector<8x128xf32>
    %cst_12 = arith.constant 1.000000e+00 : f32
    %34 = vector.broadcast %cst_12 : f32 to vector<8x128xf32>
    %35 = arith.subf %33, %34 : vector<8x128xf32>
    %36 = arith.select %30, %28, %35 : vector<8x128xi1>, vector<8x128xf32>
    %37 = arith.truncf %36 : vector<8x128xf32> to vector<8x128xbf16>
    %c128 = arith.constant 128 : index
    %c0_13 = arith.constant 0 : index
    %38 = vector.load %arg3[%c128, %c0_13] : memref<384x128xbf16, #tpu.memory_space<vmem>>, vector<128x128xbf16>
    %cst_14 = arith.constant dense<0.000000e+00> : vector<8x128xf32>
    %39 = tpu.matmul %37, %38, %cst_14 {dimension_numbers = #tpu.dot_dimension_numbers<[1], [0], [0], [1], [0, 0, 1, 1], [], []>} : vector<8x128xbf16>, vector<128x128xbf16>, vector<8x128xf32> -> vector<8x128xf32>
    %c5 = arith.constant 5 : index
    %c0_15 = arith.constant 0 : index
    %40 = vector.load %arg2[%c5, %c0_15] : memref<8x128xf32, #tpu.memory_space<vmem>>, vector<1x128xf32>
    %41 = vector.broadcast %40 : vector<1x128xf32> to vector<8x128xf32>
    %42 = arith.addf %39, %41 : vector<8x128xf32>
    %cst_16 = arith.constant 0.000000e+00 : f32
    %43 = vector.broadcast %cst_16 : f32 to vector<8x128xf32>
    %44 = arith.cmpf ogt, %42, %43 : vector<8x128xf32>
    %cst_17 = arith.constant 0.000000e+00 : f32
    %45 = vector.broadcast %cst_17 : f32 to vector<8x128xf32>
    %46 = arith.minimumf %42, %45 : vector<8x128xf32>
    %47 = math.exp %46 : vector<8x128xf32>
    %cst_18 = arith.constant 1.000000e+00 : f32
    %48 = vector.broadcast %cst_18 : f32 to vector<8x128xf32>
    %49 = arith.subf %47, %48 : vector<8x128xf32>
    %50 = arith.select %44, %42, %49 : vector<8x128xi1>, vector<8x128xf32>
    %51 = arith.truncf %50 : vector<8x128xf32> to vector<8x128xbf16>
    %c256 = arith.constant 256 : index
    %c0_19 = arith.constant 0 : index
    %52 = vector.load %arg3[%c256, %c0_19] : memref<384x128xbf16, #tpu.memory_space<vmem>>, vector<128x128xbf16>
    %cst_20 = arith.constant dense<0.000000e+00> : vector<8x128xf32>
    %53 = tpu.matmul %51, %52, %cst_20 {dimension_numbers = #tpu.dot_dimension_numbers<[1], [0], [0], [1], [0, 0, 1, 1], [], []>} : vector<8x128xbf16>, vector<128x128xbf16>, vector<8x128xf32> -> vector<8x128xf32>
    %c6 = arith.constant 6 : index
    %c0_21 = arith.constant 0 : index
    %54 = vector.load %arg2[%c6, %c0_21] : memref<8x128xf32, #tpu.memory_space<vmem>>, vector<1x128xf32>
    %55 = vector.broadcast %54 : vector<1x128xf32> to vector<8x128xf32>
    %56 = arith.addf %53, %55 : vector<8x128xf32>
    %57 = vector.extract_strided_slice %56 {offsets = [0, 0], sizes = [8, 4], strides = [1, 1]} : vector<8x128xf32> to vector<8x4xf32>
    %c0_22 = arith.constant 0 : index
    %c0_23 = arith.constant 0 : index
    %58 = vector.load %arg4[%c0_22, %c0_23] : memref<8x4xf32, #tpu.memory_space<vmem>>, vector<8x4xf32>
    tpu.vector_store %arg4[%c0_22, %c0_23], %57 {strides = array<i32>} : memref<8x4xf32, #tpu.memory_space<vmem>>, vector<8x4xf32>,
    return
  }
  func.func @transform_0(%arg0: i32) -> (i32, i32) {
    %c0_i32 = arith.constant 0 : i32
    %c0_i32_0 = arith.constant 0 : i32
    return %arg0, %c0_i32 : i32, i32
  }
  func.func @transform_1(%arg0: i32) -> (i32, i32) {
    %c0_i32 = arith.constant 0 : i32
    %c0_i32_0 = arith.constant 0 : i32
    %c0_i32_1 = arith.constant 0 : i32
    return %c0_i32, %c0_i32_0 : i32, i32
  }
  func.func @transform_2(%arg0: i32) -> (i32, i32) {
    %c0_i32 = arith.constant 0 : i32
    %c0_i32_0 = arith.constant 0 : i32
    %c0_i32_1 = arith.constant 0 : i32
    return %c0_i32, %c0_i32_0 : i32, i32
  }
  func.func @transform_3(%arg0: i32) -> (i32, i32) {
    %c0_i32 = arith.constant 0 : i32
    %c0_i32_0 = arith.constant 0 : i32
    return %arg0, %c0_i32 : i32, i32
  }
}

</mosaic_0001>

<llo_original>
// kernel: tpu_custom_call.1
$region0: #{tpu_custom_call.1}
  #allocation0 [shape = 'u32[]', space=smem, size = 0x4, offset = 0x4, fixed_abs, tag = 'smem constant byte address 0x4 - core index']
  #allocation1 [shape = 'u32[72,128]{1,0:T(1,128)}', space=vmem, size = 0x9000, scoped, tag = 'internal scratch']
  %s0 = inlined_call_operand.vmem [shape: f32[8,3], index: 0, kind: input, shape index: {}]
  %s1 = inlined_call_operand.vmem [shape: f32[8,128], index: 1, kind: input, shape index: {}]
  %s2 = inlined_call_operand.hbm [shape: bf16[384,128], index: 2, kind: input, shape index: {}]
  %s3 = inlined_call_operand.vmem [shape: f32[8,4], index: 3, kind: output, shape index: {}]
  %s4 = sld [smem:[#allocation0]]
  $region26: #{tpu_custom_call.1} parent=0
    _
  %s6 = ssub.s32 1, %s4
  %s7 = scalar_select 0, %s6, %s4
  $region1: #{tpu_custom_call.1} parent=0
    #allocation2 [shape = 'u8[98304]{0}', space=vmem, size = 0x18000, scoped, tag = 'input window, operand 2, single buffered']
    #allocation3 [shape = 's32[1]{0}', space=sflag, size = 0x4, scoped, tag = 'scoped memory for tpu_custom_call.1']
    %8 = vsyncpa [#allocation3], 0
    // Predicated region
    $region2: #{tpu_custom_call.1} parent=1 // pred_check
      _
    $region3: #{tpu_custom_call.1} parent=1 // pred_check_branch
      %10 = sbr.rel (0) target = $region5
    $region4: #{tpu_custom_call.1} parent=1 // pred_region
      _
    $region5: #{tpu_custom_call.1} parent=1 // pred_fallthru
      _
    // Predicated region
    $region6: #{tpu_custom_call.1} parent=1 // pred_check
      _
    $region7: #{tpu_custom_call.1} parent=1 // pred_check_branch
      %12 = sbr.rel (0) target = $region9
    $region8: #{tpu_custom_call.1} parent=1 // pred_region
      _
    $region9: #{tpu_custom_call.1} parent=1 // pred_fallthru
      _
    // Predicated region
    $region10: #{tpu_custom_call.1} parent=1 // pred_check
      _
    $region11: #{tpu_custom_call.1} parent=1 // pred_check_branch
      %14 = sbr.rel (0) target = $region13
    $region12: #{tpu_custom_call.1} parent=1 // pred_region
      %16 = vsyncadd [#allocation3], 0
      %s17 = sshll.u32 %s2, 4
      %s18 = int_to_ptr.hbm [resolvable:$true] %s17
      %s19 = sshll.u32 [#allocation2], 4
      %s20 = int_to_ptr.vmem [resolvable:$true] %s19
      %25 = dma.hbm_to_vmem [thread:$0]  %s18, 3072, %s20, [#allocation3], 64, 64, 4
    $region13: #{tpu_custom_call.1} parent=1 // pred_fallthru
      _
    // Predicated region
    $region14: #{tpu_custom_call.1} parent=1 // pred_check
      _
    $region15: #{tpu_custom_call.1} parent=1 // pred_check_branch
      %27 = sbr.rel (0) target = $region17
    $region16: #{tpu_custom_call.1} parent=1 // pred_region
      %29 = dma.done [#allocation3], 3072
    $region17: #{tpu_custom_call.1} parent=1 // pred_fallthru
      _
    %v30 = vld [vmem:[%s0] sm:$0xff]
    %v31 = vld [vmem:[%s1] sm:$0x1]
    %33 = vset.pattern.permute.xlu0 0
    %34 = vperm.xlu0 %33, %v30
    %v35 = vpop.permute.xlu0 %34
    %v37 = vperm.slane %v31, 0
    %v38 = vmul.f32 %v35, %v37
    %v39 = vld [vmem:[%s1 + $0x1] sm:$0x1]
    %40 = vset.pattern.permute.xlu0 1
    %41 = vperm.xlu0 %40, %v30
    %v42 = vpop.permute.xlu0 %41
    %v44 = vperm.slane %v39, 0
    %v45 = vmul.f32 %v42, %v44
    %v46 = vadd.f32 %v38, %v45
    %v47 = vld [vmem:[%s1 + $0x2] sm:$0x1]
    %48 = vset.pattern.permute.xlu0 2
    %49 = vperm.xlu0 %48, %v30
    %v50 = vpop.permute.xlu0 %49
    %v52 = vperm.slane %v47, 0
    %v53 = vmul.f32 %v50, %v52
    %v54 = vadd.f32 %v46, %v53
    %v55 = vld [vmem:[%s1 + $0x3] sm:$0x1]
    %v56 = vperm.slane %v55, 0
    %v57 = vadd.f32 %v54, %v56
    %v58 = vmax.f32 %v57, 0.0
    %v59 = vpack.c.bf16 %v58, %v58
    %v60 = vld [vmem:[#allocation2] sm:$0xf]
    %v61 = vld [vmem:[#allocation2 + $0x4] sm:$0xf]
    %v62 = vld [vmem:[#allocation2 + $0x8] sm:$0xf]
    %v63 = vld [vmem:[#allocation2 + $0xc] sm:$0xf]
    %v64 = vld [vmem:[#allocation2 + $0x10] sm:$0xf]
    %v65 = vld [vmem:[#allocation2 + $0x14] sm:$0xf]
    %v66 = vld [vmem:[#allocation2 + $0x18] sm:$0xf]
    %v67 = vld [vmem:[#allocation2 + $0x1c] sm:$0xf]
    %v68 = vld [vmem:[#allocation2 + $0x20] sm:$0xf]
    %v69 = vld [vmem:[#allocation2 + $0x24] sm:$0xf]
    %v70 = vld [vmem:[#allocation2 + $0x28] sm:$0xf]
    %v71 = vld [vmem:[#allocation2 + $0x2c] sm:$0xf]
    %v72 = vld [vmem:[#allocation2 + $0x30] sm:$0xf]
    %v73 = vld [vmem:[#allocation2 + $0x34] sm:$0xf]
    %v74 = vld [vmem:[#allocation2 + $0x38] sm:$0xf]
    %v75 = vld [vmem:[#allocation2 + $0x3c] sm:$0xf]
    %v76 = vld [vmem:[%s1 + $0x4] sm:$0x1]
    %v77 = vperm.slane %v76, 0
    %v94 = vunpack.c.l.b16 %v60
    %v95 = vunpack.c.l.b16 %v61
    %v96 = vunpack.c.l.b16 %v62
    %v97 = vunpack.c.l.b16 %v63
    %v98 = vunpack.c.l.b16 %v64
    %v99 = vunpack.c.l.b16 %v65
    %v100 = vunpack.c.l.b16 %v66
    %v101 = vunpack.c.l.b16 %v67
    %v102 = vunpack.c.l.b16 %v68
    %v103 = vunpack.c.l.b16 %v69
    %v104 = vunpack.c.l.b16 %v70
    %v105 = vunpack.c.l.b16 %v71
    %v106 = vunpack.c.l.b16 %v72
    %v107 = vunpack.c.l.b16 %v73
    %v108 = vunpack.c.l.b16 %v74
    %v109 = vunpack.c.l.b16 %v75
    %v110 = vpack.c.b16 %v95, %v94
    %v111 = vpack.c.b16 %v97, %v96
    %v112 = vpack.c.b16 %v99, %v98
    %v113 = vpack.c.b16 %v101, %v100
    %v114 = vpack.c.b16 %v103, %v102
    %v115 = vpack.c.b16 %v105, %v104
    %v116 = vpack.c.b16 %v107, %v106
    %v117 = vpack.c.b16 %v109, %v108
    %126 = vmatpush.bf16.msra.mxu0 %v117
    %127 = vmatpush.bf16.msra.mxu0 %v116
    %128 = vmatpush.bf16.msra.mxu0 %v115
    %129 = vmatpush.bf16.msra.mxu0 %v114
    %130 = vmatpush.bf16.msra.mxu0 %v113
    %131 = vmatpush.bf16.msra.mxu0 %v112
    %132 = vmatpush.bf16.msra.mxu0 %v111
    %133 = vmatpush.bf16.msra.mxu0 %v110
    %134 = vmatmul.bf16.gmra.mxu0 %v59
    %v135 = vpop.f32.mrf.mxu0
    %v136 = vadd.f32 %v77, %v135
    %v137 = vpop.f32.mrf.mxu0
    %138 = vdwg.mxu0
    %vm139 = vcmp.gt.f32.partialorder %v136, 0.0
    %v140 = vmin.f32 %v136, 0.0
    %v141 = vmul.f32 %v140, 1.442695
    %v142 = vpow.pop %v141
    %v143 = vsub.f32 %v142, 1.0
    %v144 = vsel %vm139, %v136, %v143
    %v145 = vpack.c.bf16 %v144, %v144
    %v146 = vld [vmem:[#allocation2 + $0x40] sm:$0xf]
    %v147 = vld [vmem:[#allocation2 + $0x44] sm:$0xf]
    %v148 = vld [vmem:[#allocation2 + $0x48] sm:$0xf]
    %v149 = vld [vmem:[#allocation2 + $0x4c] sm:$0xf]
    %v150 = vld [vmem:[#allocation2 + $0x50] sm:$0xf]
    %v151 = vld [vmem:[#allocation2 + $0x54] sm:$0xf]
    %v152 = vld [vmem:[#allocation2 + $0x58] sm:$0xf]
    %v153 = vld [vmem:[#allocation2 + $0x5c] sm:$0xf]
    %v154 = vld [vmem:[#allocation2 + $0x60] sm:$0xf]
    %v155 = vld [vmem:[#allocation2 + $0x64] sm:$0xf]
    %v156 = vld [vmem:[#allocation2 + $0x68] sm:$0xf]
    %v157 = vld [vmem:[#allocation2 + $0x6c] sm:$0xf]
    %v158 = vld [vmem:[#allocation2 + $0x70] sm:$0xf]
    %v159 = vld [vmem:[#allocation2 + $0x74] sm:$0xf]
    %v160 = vld [vmem:[#allocation2 + $0x78] sm:$0xf]
    %v161 = vld [vmem:[#allocation2 + $0x7c] sm:$0xf]
    %v162 = vld [vmem:[%s1 + $0x5] sm:$0x1]
    %v163 = vperm.slane %v162, 0
    %v180 = vunpack.c.l.b16 %v146
    %v181 = vunpack.c.l.b16 %v147
    %v182 = vunpack.c.l.b16 %v148
    %v183 = vunpack.c.l.b16 %v149
    %v184 = vunpack.c.l.b16 %v150
    %v185 = vunpack.c.l.b16 %v151
    %v186 = vunpack.c.l.b16 %v152
    %v187 = vunpack.c.l.b16 %v153
    %v188 = vunpack.c.l.b16 %v154
    %v189 = vunpack.c.l.b16 %v155
    %v190 = vunpack.c.l.b16 %v156
    %v191 = vunpack.c.l.b16 %v157
    %v192 = vunpack.c.l.b16 %v158
    %v193 = vunpack.c.l.b16 %v159
    %v194 = vunpack.c.l.b16 %v160
    %v195 = vunpack.c.l.b16 %v161
    %v196 = vpack.c.b16 %v181, %v180
    %v197 = vpack.c.b16 %v183, %v182
    %v198 = vpack.c.b16 %v185, %v184
    %v199 = vpack.c.b16 %v187, %v186
    %v200 = vpack.c.b16 %v189, %v188
    %v201 = vpack.c.b16 %v191, %v190
    %v202 = vpack.c.b16 %v193, %v192
    %v203 = vpack.c.b16 %v195, %v194
    %212 = vmatpush.bf16.msra.mxu0 %v203
    %213 = vmatpush.bf16.msra.mxu0 %v202
    %214 = vmatpush.bf16.msra.mxu0 %v201
    %215 = vmatpush.bf16.msra.mxu0 %v200
    %216 = vmatpush.bf16.msra.mxu0 %v199
    %217 = vmatpush.bf16.msra.mxu0 %v198
    %218 = vmatpush.bf16.msra.mxu0 %v197
    %219 = vmatpush.bf16.msra.mxu0 %v196
    %220 = vmatmul.bf16.gmra.mxu0 %v145
    %v221 = vpop.f32.mrf.mxu0
    %v222 = vadd.f32 %v163, %v221
    %v223 = vpop.f32.mrf.mxu0
    %224 = vdwg.mxu0
    %vm225 = vcmp.gt.f32.partialorder %v222, 0.0
    %v226 = vmin.f32 %v222, 0.0
    %v227 = vmul.f32 %v226, 1.442695
    %v228 = vpow.pop %v227
    %v229 = vsub.f32 %v228, 1.0
    %v230 = vsel %vm225, %v222, %v229
    %v231 = vpack.c.bf16 %v230, %v230
    %v232 = vld [vmem:[#allocation2 + $0x80] sm:$0xf]
    %v233 = vld [vmem:[#allocation2 + $0x84] sm:$0xf]
    %v234 = vld [vmem:[#allocation2 + $0x88] sm:$0xf]
    %v235 = vld [vmem:[#allocation2 + $0x8c] sm:$0xf]
    %v236 = vld [vmem:[#allocation2 + $0x90] sm:$0xf]
    %v237 = vld [vmem:[#allocation2 + $0x94] sm:$0xf]
    %v238 = vld [vmem:[#allocation2 + $0x98] sm:$0xf]
    %v239 = vld [vmem:[#allocation2 + $0x9c] sm:$0xf]
    %v240 = vld [vmem:[#allocation2 + $0xa0] sm:$0xf]
    %v241 = vld [vmem:[#allocation2 + $0xa4] sm:$0xf]
    %v242 = vld [vmem:[#allocation2 + $0xa8] sm:$0xf]
    %v243 = vld [vmem:[#allocation2 + $0xac] sm:$0xf]
    %v244 = vld [vmem:[#allocation2 + $0xb0] sm:$0xf]
    %v245 = vld [vmem:[#allocation2 + $0xb4] sm:$0xf]
    %v246 = vld [vmem:[#allocation2 + $0xb8] sm:$0xf]
    %v247 = vld [vmem:[#allocation2 + $0xbc] sm:$0xf]
    %v248 = vld [vmem:[%s1 + $0x6] sm:$0x1]
    %v249 = vperm.slane %v248, 0
    %v266 = vunpack.c.l.b16 %v232
    %v267 = vunpack.c.l.b16 %v233
    %v268 = vunpack.c.l.b16 %v234
    %v269 = vunpack.c.l.b16 %v235
    %v270 = vunpack.c.l.b16 %v236
    %v271 = vunpack.c.l.b16 %v237
    %v272 = vunpack.c.l.b16 %v238
    %v273 = vunpack.c.l.b16 %v239
    %v274 = vunpack.c.l.b16 %v240
    %v275 = vunpack.c.l.b16 %v241
    %v276 = vunpack.c.l.b16 %v242
    %v277 = vunpack.c.l.b16 %v243
    %v278 = vunpack.c.l.b16 %v244
    %v279 = vunpack.c.l.b16 %v245
    %v280 = vunpack.c.l.b16 %v246
    %v281 = vunpack.c.l.b16 %v247
    %v282 = vpack.c.b16 %v267, %v266
    %v283 = vpack.c.b16 %v269, %v268
    %v284 = vpack.c.b16 %v271, %v270
    %v285 = vpack.c.b16 %v273, %v272
    %v286 = vpack.c.b16 %v275, %v274
    %v287 = vpack.c.b16 %v277, %v276
    %v288 = vpack.c.b16 %v279, %v278
    %v289 = vpack.c.b16 %v281, %v280
    %298 = vmatpush.bf16.msra.mxu0 %v289
    %299 = vmatpush.bf16.msra.mxu0 %v288
    %300 = vmatpush.bf16.msra.mxu0 %v287
    %301 = vmatpush.bf16.msra.mxu0 %v286
    %302 = vmatpush.bf16.msra.mxu0 %v285
    %303 = vmatpush.bf16.msra.mxu0 %v284
    %304 = vmatpush.bf16.msra.mxu0 %v283
    %305 = vmatpush.bf16.msra.mxu0 %v282
    %306 = vmatmul.bf16.gmra.mxu0 %v231
    %v307 = vpop.f32.mrf.mxu0
    %v308 = vadd.f32 %v249, %v307
    %v309 = vpop.f32.mrf.mxu0
    %310 = vdwg.mxu0
    %vm311 = vcmask 31744
    %312 = vst.msk [vmem:[%s3] sm:$0xff] %vm311, %v308
    // Predicated region
    $region18: #{tpu_custom_call.1} parent=1 // pred_check
      _
    $region19: #{tpu_custom_call.1} parent=1 // pred_check_branch
      %314 = sbr.rel (0) target = $region21
    $region20: #{tpu_custom_call.1} parent=1 // pred_region
      _
    $region21: #{tpu_custom_call.1} parent=1 // pred_fallthru
      _
    // Predicated region
    $region22: #{tpu_custom_call.1} parent=1 // pred_check
      _
    $region23: #{tpu_custom_call.1} parent=1 // pred_check_branch
      %316 = sbr.rel (0) target = $region25
    $region24: #{tpu_custom_call.1} parent=1 // pred_region
      _
    $region25: #{tpu_custom_call.1} parent=1 // pred_fallthru
      _
    %317 = vsyncpa [#allocation3], 1

</llo_original>
